<compile_context>
chip_gen: v7x
topology: tpu7x:2x2x1
jax: 0.10.0
libtpu: 0.0.40
codegen_flags: <defaults>
</compile_context>

<pallas_src>
import numpy as np
import jax
import jax.numpy as jnp
from jax.experimental import pallas as pl
from jax.experimental.pallas import tpu as pltpu


# ----------------------------------------------------------------------------
# Host-side constant construction (trace-time, numpy)
# ----------------------------------------------------------------------------
def _gauss_1d(window_size=11, sigma=1.5):
    xs = np.arange(window_size)
    g = np.exp(-((xs - window_size // 2) ** 2) / (2.0 * sigma ** 2))
    return (g / g.sum()).astype(np.float32)


def _conv_matrix(n, g1d):
    """Banded matrix M with (M @ x) == zero-padded 1-D conv of x with g1d."""
    ws = len(g1d)
    half = ws // 2
    m = np.zeros((n, n), np.float32)
    for i in range(n):
        for k in range(ws):
            j = i + k - half
            if 0 <= j < n:
                m[i, j] = g1d[k]
    return m


def _choose_tiling(bc, w):
    """Pick images/slice, slices/step (K), grid size G, padded batch."""
    assert 128 % w == 0, "lane-dense path requires W dividing 128"
    # TODO(synk): support W not dividing 128 (needs in-image lane padding logic).
    ips = 128 // w                         # images per 128-lane slice
    s_min = -(-bc // ips)                  # slices holding real data
    k = min(4, s_min)                      # target ~512 lanes per grid step
    if s_min >= 2 and k > s_min // 2:      # keep G >= 2 when data permits (v7x)
        k = max(1, s_min // 2)
    s_total = -(-s_min // k) * k           # pad slice count to a multiple of K
    g = s_total // k
    return ips, k, g, s_total * ips


# ----------------------------------------------------------------------------
# Kernel: one block of K 128-lane slices, inputs stacked as (3H, K*128)
# ----------------------------------------------------------------------------
def _make_loss_kernel(H, K):
    L = K * 128
    C1 = np.float32(0.01 ** 2)
    C2 = np.float32(0.03 ** 2)

    def kernel(stk_ref, a5_ref, bbd_ref, out_ref):
        stk = stk_ref[...]                         # (3H, L) f32: [gt; cm; skin]
        g = stk[0:H, :]
        cm = stk[H:2 * H, :]
        sk = stk[2 * H:3 * H, :]

        # Masked MAE partial sums: sublane-only reductions, kept lane-dense.
        mae_rows = jnp.sum(jnp.abs(sk * (g - cm)), axis=0, keepdims=True)   # (1, L)
        skin_rows = jnp.sum(sk, axis=0, keepdims=True)                      # (1, L)

        # Fused 5-way separable Gaussian conv: one row-conv matmul for all maps.
        x5 = jnp.concatenate([g, cm, g * g, cm * cm, g * cm], axis=0)       # (5H, L)
        t5 = jnp.dot(a5_ref[...], x5, preferred_element_type=jnp.float32)   # (5H, L)

        bbd = bbd_ref[...]                                                  # (128,128)
        ssim_parts = []
        for s in range(K):                         # static, K is small
            conv = jnp.dot(t5[:, s * 128:(s + 1) * 128], bbd,
                           preferred_element_type=jnp.float32)              # (5H,128)
            mu1 = conv[0:H]
            mu2 = conv[H:2 * H]
            e11 = conv[2 * H:3 * H]
            e22 = conv[3 * H:4 * H]
            e12 = conv[4 * H:5 * H]
            mu1_sq = mu1 * mu1
            mu2_sq = mu2 * mu2
            mu12 = mu1 * mu2
            sig1 = e11 - mu1_sq
            sig2 = e22 - mu2_sq
            sig12 = e12 - mu12
            num = (2.0 * mu12 + C1) * (2.0 * sig12 + C2)
            den = (mu1_sq + mu2_sq + C1) * (sig1 + sig2 + C2)
            ssim_parts.append(jnp.sum(num / den, axis=0, keepdims=True))    # (1,128)
        ssim_rows = (ssim_parts[0] if K == 1
                     else jnp.concatenate(ssim_parts, axis=1))              # (1, L)

        # Lane-dense per-step partials: rows 0/1/2 = mae / skin / ssim row-sums.
        out_ref[0, 0:1, :] = mae_rows
        out_ref[0, 1:2, :] = skin_rows
        out_ref[0, 2:3, :] = ssim_rows
        out_ref[0, 3:8, :] = jnp.zeros((5, L), jnp.float32)

    return kernel


# ----------------------------------------------------------------------------
# Wrapper
# ----------------------------------------------------------------------------
@jax.jit
def _masked_mae_plus_ssim_jit(gt, comp, skin, ssim_weight):
    N, C, H, W = gt.shape
    BC = N * C
    ips, K, G, BC_pad = _choose_tiling(BC, W)
    pad = BC_pad - BC
    L_step = K * 128
    L_total = BC_pad * W

    # Trace-time constants.
    g1d = _gauss_1d(11, 1.5)
    a5 = jnp.asarray(np.kron(np.eye(5, dtype=np.float32), _conv_matrix(H, g1d)),
                     jnp.float32)                                   # (5H, 5H)
    bbd = jnp.asarray(np.kron(np.eye(ips, dtype=np.float32), _conv_matrix(W, g1d)),
                      jnp.float32)                                  # (128, 128)

    gt_f = gt.reshape(BC, H, W).astype(jnp.float32)
    comp_f = comp.reshape(BC, H, W).astype(jnp.float32)
    skin_f = skin.reshape(BC, H, W).astype(jnp.float32)
    # comp[skin == 0] = -1000 (functional copy, fused into the relayout pass).
    cm_f = jnp.where(skin_f == 0.0, jnp.float32(-1000.0), comp_f)

    if pad:
        z = jnp.zeros((pad, H, W), jnp.float32)
        gt_f = jnp.concatenate([gt_f, z], axis=0)
        cm_f = jnp.concatenate([cm_f, z], axis=0)
        skin_f = jnp.concatenate([skin_f, z], axis=0)

    def to_lanes(x):  # (BC_pad, H, W) -> (H, BC_pad*W), images packed along lanes
        return x.transpose(1, 0, 2).reshape(H, L_total)
    # TODO(synk): for HBM-bound sizes, accept a lane-dense producer layout instead
    # of this relayout (or DMA-gather from (BC,H,W) with memory_space=pl.ANY).

    stacked = jnp.concatenate([to_lanes(gt_f), to_lanes(cm_f), to_lanes(skin_f)],
                              axis=0)                               # (3H, G*K*128)

    partials = pl.pallas_call(
        _make_loss_kernel(H, K),
        out_shape=jax.ShapeDtypeStruct((G, 8, L_step), jnp.float32),
        grid_spec=pltpu.PrefetchScalarGridSpec(
            num_scalar_prefetch=0,
            grid=(G,),
            in_specs=[
                pl.BlockSpec((3 * H, L_step), lambda i: (0, i)),    # coalesced imgs
                pl.BlockSpec((5 * H, 5 * H), lambda i: (0, 0)),     # grid-invariant
                pl.BlockSpec((128, 128), lambda i: (0, 0)),         # grid-invariant
            ],
            out_specs=pl.BlockSpec((1, 8, L_step), lambda i: (i, 0, 0)),
        ),
        compiler_params=pltpu.CompilerParams(
            dimension_semantics=("parallel",),
            vmem_limit_bytes=32 * 1024 * 1024),
    )(stacked, a5, bbd)

    mae_sum = jnp.sum(partials[:, 0, :])
    skin_sum = jnp.sum(partials[:, 1, :])
    # Each zero-padded image contributes exactly H*W to the raw ssim sum.
    ssim_sum = jnp.sum(partials[:, 2, :]) - jnp.float32(pad * H * W)

    masked_mae = mae_sum / skin_sum
    ssim = ssim_sum / jnp.float32(BC * H * W)
    ssim_loss = 1.0 - ssim
    total_ssim = ssim_weight * ssim_loss
    return masked_mae, ssim_loss, total_ssim, masked_mae + total_ssim


def masked_mae_plus_ssim(gt, comp, skin, ssim_weight):
    mae, ssim_loss, total_ssim, loss = _masked_mae_plus_ssim_jit(
        gt, comp, skin, jnp.float32(ssim_weight))
    # Mirrors the PyTorch module's print (host side, after the jitted compute).
    print('MAE = %.2f -- SSIM = %.2f -- TOTAL SSIM = %.2f'
          % (float(mae), float(ssim_loss), float(total_ssim)))
    return loss


if __name__ == "__main__":
    key = jax.random.PRNGKey(0)
    k1, k2, k3 = jax.random.split(key, 3)
    N, C, H, W = 2, 4, 16, 16
    gt = jax.random.uniform(k1, (N, C, H, W), dtype=jnp.float32)
    comp = jax.random.uniform(k2, (N, C, H, W), dtype=jnp.float32)
    skin = (jax.random.uniform(k3, (N, C, H, W)) > 0.5).astype(jnp.float32)
    ssim_weight = 0.1

    out = masked_mae_plus_ssim(gt, comp, skin, ssim_weight)
    jax.block_until_ready(out)
    print("KERNEL_OK")
</pallas_src>

<mosaic_0001>
module attributes {stable_mosaic.version = 11 : i64} {
  func.func @kernel(%arg0: i32, %arg1: memref<48x128xf32, #tpu.memory_space<vmem>>, %arg2: memref<80x80xf32, #tpu.memory_space<vmem>>, %arg3: memref<128x128xf32, #tpu.memory_space<vmem>>, %arg4: memref<1x8x128xf32, #tpu.memory_space<vmem>>) attributes {dimension_semantics = [#tpu.dimension_semantics<parallel>], iteration_bounds = array<i64: 1>, scalar_prefetch = 0 : i64, scratch_operands = 0 : i64, tpu.core_type = #tpu.core_type<tc>, window_params = [{transform_indices = @transform_0, window_bounds = array<i64: 48, 128>}, {pipeline_mode = #tpu.pipeline_mode<synchronous>, transform_indices = @transform_1, window_bounds = array<i64: 80, 80>}, {pipeline_mode = #tpu.pipeline_mode<synchronous>, transform_indices = @transform_2, window_bounds = array<i64: 128, 128>}, {transform_indices = @transform_3, window_bounds = array<i64: 1, 8, 128>}]} {
    %c0 = arith.constant 0 : index
    %c0_0 = arith.constant 0 : index
    %0 = vector.load %arg1[%c0, %c0_0] : memref<48x128xf32, #tpu.memory_space<vmem>>, vector<48x128xf32>
    %1 = vector.extract_strided_slice %0 {offsets = [0, 0], sizes = [16, 128], strides = [1, 1]} : vector<48x128xf32> to vector<16x128xf32>
    %2 = vector.extract_strided_slice %0 {offsets = [16, 0], sizes = [16, 128], strides = [1, 1]} : vector<48x128xf32> to vector<16x128xf32>
    %3 = vector.extract_strided_slice %0 {offsets = [32, 0], sizes = [16, 128], strides = [1, 1]} : vector<48x128xf32> to vector<16x128xf32>
    %4 = arith.subf %1, %2 : vector<16x128xf32>
    %5 = arith.mulf %3, %4 : vector<16x128xf32>
    %6 = math.absf %5 : vector<16x128xf32>
    %cst = arith.constant dense<0.000000e+00> : vector<128xf32>
    %7 = vector.multi_reduction <add>, %6, %cst [0] : vector<16x128xf32> to vector<128xf32>
    %8 = vector.shape_cast %7 : vector<128xf32> to vector<1x128xf32>
    %cst_1 = arith.constant dense<0.000000e+00> : vector<128xf32>
    %9 = vector.multi_reduction <add>, %3, %cst_1 [0] : vector<16x128xf32> to vector<128xf32>
    %10 = vector.shape_cast %9 : vector<128xf32> to vector<1x128xf32>
    %11 = arith.mulf %1, %1 : vector<16x128xf32>
    %12 = arith.mulf %2, %2 : vector<16x128xf32>
    %13 = arith.mulf %1, %2 : vector<16x128xf32>
    %14 = tpu.concatenate %1, %2, %11, %12, %13 in 0 : vector<16x128xf32>, vector<16x128xf32>, vector<16x128xf32>, vector<16x128xf32>, vector<16x128xf32> -> vector<80x128xf32>
    %c0_2 = arith.constant 0 : index
    %c0_3 = arith.constant 0 : index
    %15 = vector.load %arg2[%c0_2, %c0_3] : memref<80x80xf32, #tpu.memory_space<vmem>>, vector<80x80xf32>
    %cst_4 = arith.constant dense<0.000000e+00> : vector<80x128xf32>
    %16 = tpu.matmul %15, %14, %cst_4 {dimension_numbers = #tpu.dot_dimension_numbers<[1], [0], [0], [1], [0, 0, 1, 1], [], []>} : vector<80x80xf32>, vector<80x128xf32>, vector<80x128xf32> -> vector<80x128xf32>
    %c0_5 = arith.constant 0 : index
    %c0_6 = arith.constant 0 : index
    %17 = vector.load %arg3[%c0_5, %c0_6] : memref<128x128xf32, #tpu.memory_space<vmem>>, vector<128x128xf32>
    %cst_7 = arith.constant dense<0.000000e+00> : vector<80x128xf32>
    %18 = tpu.matmul %16, %17, %cst_7 {dimension_numbers = #tpu.dot_dimension_numbers<[1], [0], [0], [1], [0, 0, 1, 1], [], []>} : vector<80x128xf32>, vector<128x128xf32>, vector<80x128xf32> -> vector<80x128xf32>
    %19 = vector.extract_strided_slice %18 {offsets = [0, 0], sizes = [16, 128], strides = [1, 1]} : vector<80x128xf32> to vector<16x128xf32>
    %20 = vector.extract_strided_slice %18 {offsets = [16, 0], sizes = [16, 128], strides = [1, 1]} : vector<80x128xf32> to vector<16x128xf32>
    %21 = vector.extract_strided_slice %18 {offsets = [32, 0], sizes = [16, 128], strides = [1, 1]} : vector<80x128xf32> to vector<16x128xf32>
    %22 = vector.extract_strided_slice %18 {offsets = [48, 0], sizes = [16, 128], strides = [1, 1]} : vector<80x128xf32> to vector<16x128xf32>
    %23 = vector.extract_strided_slice %18 {offsets = [64, 0], sizes = [16, 128], strides = [1, 1]} : vector<80x128xf32> to vector<16x128xf32>
    %24 = arith.mulf %19, %19 : vector<16x128xf32>
    %25 = arith.mulf %20, %20 : vector<16x128xf32>
    %26 = arith.mulf %19, %20 : vector<16x128xf32>
    %27 = arith.subf %21, %24 : vector<16x128xf32>
    %28 = arith.subf %22, %25 : vector<16x128xf32>
    %29 = arith.subf %23, %26 : vector<16x128xf32>
    %cst_8 = arith.constant 2.000000e+00 : f32
    %30 = vector.broadcast %cst_8 : f32 to vector<16x128xf32>
    %31 = arith.mulf %30, %26 : vector<16x128xf32>
    %cst_9 = arith.constant 9.99999974E-5 : f32
    %32 = vector.broadcast %cst_9 : f32 to vector<16x128xf32>
    %33 = arith.addf %31, %32 : vector<16x128xf32>
    %cst_10 = arith.constant 2.000000e+00 : f32
    %34 = vector.broadcast %cst_10 : f32 to vector<16x128xf32>
    %35 = arith.mulf %34, %29 : vector<16x128xf32>
    %cst_11 = arith.constant 8.99999984E-4 : f32
    %36 = vector.broadcast %cst_11 : f32 to vector<16x128xf32>
    %37 = arith.addf %35, %36 : vector<16x128xf32>
    %38 = arith.mulf %33, %37 : vector<16x128xf32>
    %39 = arith.addf %24, %25 : vector<16x128xf32>
    %cst_12 = arith.constant 9.99999974E-5 : f32
    %40 = vector.broadcast %cst_12 : f32 to vector<16x128xf32>
    %41 = arith.addf %39, %40 : vector<16x128xf32>
    %42 = arith.addf %27, %28 : vector<16x128xf32>
    %cst_13 = arith.constant 8.99999984E-4 : f32
    %43 = vector.broadcast %cst_13 : f32 to vector<16x128xf32>
    %44 = arith.addf %42, %43 : vector<16x128xf32>
    %45 = arith.mulf %41, %44 : vector<16x128xf32>
    %46 = arith.divf %38, %45 : vector<16x128xf32>
    %cst_14 = arith.constant dense<0.000000e+00> : vector<128xf32>
    %47 = vector.multi_reduction <add>, %46, %cst_14 [0] : vector<16x128xf32> to vector<128xf32>
    %48 = vector.shape_cast %47 : vector<128xf32> to vector<1x128xf32>
    %c0_15 = arith.constant 0 : index
    %c0_16 = arith.constant 0 : index
    %c0_17 = arith.constant 0 : index
    %49 = vector.load %arg4[%c0_15, %c0_16, %c0_17] : memref<1x8x128xf32, #tpu.memory_space<vmem>>, vector<1x1x128xf32>
    %50 = vector.shape_cast %49 : vector<1x1x128xf32> to vector<1x128xf32>
    %51 = vector.shape_cast %8 : vector<1x128xf32> to vector<1x1x128xf32>
    tpu.vector_store %arg4[%c0_15, %c0_16, %c0_17], %51 {strides = array<i32>} : memref<1x8x128xf32, #tpu.memory_space<vmem>>, vector<1x1x128xf32>,
    %c0_18 = arith.constant 0 : index
    %c1 = arith.constant 1 : index
    %c0_19 = arith.constant 0 : index
    %52 = vector.load %arg4[%c0_18, %c1, %c0_19] : memref<1x8x128xf32, #tpu.memory_space<vmem>>, vector<1x1x128xf32>
    %53 = vector.shape_cast %52 : vector<1x1x128xf32> to vector<1x128xf32>
    %54 = vector.shape_cast %10 : vector<1x128xf32> to vector<1x1x128xf32>
    tpu.vector_store %arg4[%c0_18, %c1, %c0_19], %54 {strides = array<i32>} : memref<1x8x128xf32, #tpu.memory_space<vmem>>, vector<1x1x128xf32>,
    %c0_20 = arith.constant 0 : index
    %c2 = arith.constant 2 : index
    %c0_21 = arith.constant 0 : index
    %55 = vector.load %arg4[%c0_20, %c2, %c0_21] : memref<1x8x128xf32, #tpu.memory_space<vmem>>, vector<1x1x128xf32>
    %56 = vector.shape_cast %55 : vector<1x1x128xf32> to vector<1x128xf32>
    %57 = vector.shape_cast %48 : vector<1x128xf32> to vector<1x1x128xf32>
    tpu.vector_store %arg4[%c0_20, %c2, %c0_21], %57 {strides = array<i32>} : memref<1x8x128xf32, #tpu.memory_space<vmem>>, vector<1x1x128xf32>,
    %cst_22 = arith.constant 0.000000e+00 : f32
    %58 = vector.broadcast %cst_22 : f32 to vector<5x128xf32>
    %c0_23 = arith.constant 0 : index
    %c3 = arith.constant 3 : index
    %c0_24 = arith.constant 0 : index
    %59 = vector.load %arg4[%c0_23, %c3, %c0_24] : memref<1x8x128xf32, #tpu.memory_space<vmem>>, vector<1x5x128xf32>
    %60 = vector.shape_cast %59 : vector<1x5x128xf32> to vector<5x128xf32>
    %61 = vector.shape_cast %58 : vector<5x128xf32> to vector<1x5x128xf32>
    tpu.vector_store %arg4[%c0_23, %c3, %c0_24], %61 {strides = array<i32>} : memref<1x8x128xf32, #tpu.memory_space<vmem>>, vector<1x5x128xf32>,
    return
  }
  func.func @transform_0(%arg0: i32) -> (i32, i32) {
    %c0_i32 = arith.constant 0 : i32
    %c0_i32_0 = arith.constant 0 : i32
    return %c0_i32, %arg0 : i32, i32
  }
  func.func @transform_1(%arg0: i32) -> (i32, i32) {
    %c0_i32 = arith.constant 0 : i32
    %c0_i32_0 = arith.constant 0 : i32
    %c0_i32_1 = arith.constant 0 : i32
    return %c0_i32, %c0_i32_0 : i32, i32
  }
  func.func @transform_2(%arg0: i32) -> (i32, i32) {
    %c0_i32 = arith.constant 0 : i32
    %c0_i32_0 = arith.constant 0 : i32
    %c0_i32_1 = arith.constant 0 : i32
    return %c0_i32, %c0_i32_0 : i32, i32
  }
  func.func @transform_3(%arg0: i32) -> (i32, i32, i32) {
    %c0_i32 = arith.constant 0 : i32
    %c0_i32_0 = arith.constant 0 : i32
    %c0_i32_1 = arith.constant 0 : i32
    return %arg0, %c0_i32, %c0_i32_0 : i32, i32, i32
  }
}

</mosaic_0001>

<llo_original>
// kernel: _masked_mae_plus_ssim_jit.1
$region0: #{_masked_mae_plus_ssim_jit.1}
  #allocation0 [shape = 'u32[]', space=smem, size = 0x4, offset = 0x4, fixed_abs, tag = 'smem constant byte address 0x4 - core index']
  #allocation1 [shape = 'u32[144,128]{1,0:T(1,128)}', space=vmem, size = 0x12000, scoped, tag = 'internal scratch']
  %s0 = inlined_call_operand.vmem [shape: f32[48,128], index: 0, kind: input, shape index: {}]
  %s1 = inlined_call_operand.vmem [shape: f32[80,80], index: 1, kind: input, shape index: {}]
  %s2 = inlined_call_operand.vmem [shape: f32[128,128], index: 2, kind: input, shape index: {}]
  %s3 = inlined_call_operand.vmem [shape: f32[1,8,128], index: 3, kind: output, shape index: {}]
  %s4 = sld [smem:[#allocation0]]
  $region22: #{_masked_mae_plus_ssim_jit.1} parent=0
    _
  %s6 = ssub.s32 1, %s4
  %s7 = scalar_select 0, %s6, %s4
  // Predicated region
  $region2: #{_masked_mae_plus_ssim_jit.1} parent=0 // pred_check
    _
  $region3: #{_masked_mae_plus_ssim_jit.1} parent=0 // pred_check_branch
    %9 = sbr.rel (0) target = $region5
  $region4: #{_masked_mae_plus_ssim_jit.1} parent=0 // pred_region
    _
  $region5: #{_masked_mae_plus_ssim_jit.1} parent=0 // pred_fallthru
    _
  // Predicated region
  $region6: #{_masked_mae_plus_ssim_jit.1} parent=0 // pred_check
    _
  $region7: #{_masked_mae_plus_ssim_jit.1} parent=0 // pred_check_branch
    %11 = sbr.rel (0) target = $region9
  $region8: #{_masked_mae_plus_ssim_jit.1} parent=0 // pred_region
    _
  $region9: #{_masked_mae_plus_ssim_jit.1} parent=0 // pred_fallthru
    _
  // Predicated region
  $region10: #{_masked_mae_plus_ssim_jit.1} parent=0 // pred_check
    _
  $region11: #{_masked_mae_plus_ssim_jit.1} parent=0 // pred_check_branch
    %13 = sbr.rel (0) target = $region13
  $region12: #{_masked_mae_plus_ssim_jit.1} parent=0 // pred_region
    _
  $region13: #{_masked_mae_plus_ssim_jit.1} parent=0 // pred_fallthru
    _
  %v14 = vld [vmem:[%s0] sm:$0xff]
  %v15 = vld [vmem:[%s0 + $0x8] sm:$0xff]
  %v16 = vld [vmem:[%s0 + $0x10] sm:$0xff]
  %v17 = vld [vmem:[%s0 + $0x18] sm:$0xff]
  %v18 = vld [vmem:[%s0 + $0x20] sm:$0xff]
  %v19 = vld [vmem:[%s0 + $0x28] sm:$0xff]
  %v20 = vsub.f32 %v14, %v16
  %v21 = vsub.f32 %v15, %v17
  %v22 = vmul.f32 %v18, %v20
  %v23 = vmul.f32 %v19, %v21
  %v24 = vand.u32 2147483647, %v22
  %v25 = vand.u32 2147483647, %v23
  %v26 = vadd.f32 %v24, %v25
  %v27 = vrot.slane %v26, 4
  %v28 = vadd.f32 %v26, %v27
  %v29 = vrot.slane %v28, 2
  %v30 = vadd.f32 %v28, %v29
  %v31 = vrot.slane %v30, 1
  %v32 = vadd.f32 %v30, %v31
  %v33 = vadd.f32 %v18, %v19
  %v34 = vrot.slane %v33, 4
  %v35 = vadd.f32 %v33, %v34
  %v36 = vrot.slane %v35, 2
  %v37 = vadd.f32 %v35, %v36
  %v38 = vrot.slane %v37, 1
  %v39 = vadd.f32 %v37, %v38
  %v40 = vmul.f32 %v14, %v14
  %v41 = vmul.f32 %v15, %v15
  %v42 = vmul.f32 %v16, %v16
  %v43 = vmul.f32 %v17, %v17
  %v44 = vmul.f32 %v14, %v16
  %v45 = vmul.f32 %v15, %v17
  %v46 = vld [vmem:[%s1] sm:$0xff]
  %v47 = vld [vmem:[%s1 + $0x8] sm:$0xff]
  %v48 = vld [vmem:[%s1 + $0x10] sm:$0xff]
  %v49 = vld [vmem:[%s1 + $0x18] sm:$0xff]
  %v50 = vld [vmem:[%s1 + $0x20] sm:$0xff]
  %v51 = vld [vmem:[%s1 + $0x28] sm:$0xff]
  %v52 = vld [vmem:[%s1 + $0x30] sm:$0xff]
  %v53 = vld [vmem:[%s1 + $0x38] sm:$0xff]
  %v54 = vld [vmem:[%s1 + $0x40] sm:$0xff]
  %v55 = vld [vmem:[%s1 + $0x48] sm:$0xff]
  %vm56 = vcmask 654336
  %v58 = vsel %vm56, %v46, 0
  %v61 = vsel %vm56, %v47, 0
  %v64 = vsel %vm56, %v48, 0
  %v67 = vsel %vm56, %v49, 0
  %v70 = vsel %vm56, %v50, 0
  %v73 = vsel %vm56, %v51, 0
  %v76 = vsel %vm56, %v52, 0
  %v79 = vsel %vm56, %v53, 0
  %v82 = vsel %vm56, %v54, 0
  %v85 = vsel %vm56, %v55, 0
  %87 = vmatprep.subr.mxu0 0.0
  %88 = vmatpush1.msra.mxu0 %v14
  %89 = vmatprep.subr.mxu0 0.0
  %90 = vmatpush1.msra.mxu0 %v15
  %91 = vmatprep.subr.mxu0 0.0
  %92 = vmatpush1.msra.mxu0 %v16
  %93 = vmatprep.subr.mxu0 0.0
  %94 = vmatpush1.msra.mxu0 %v17
  %95 = vmatprep.subr.mxu0 0.0
  %96 = vmatpush1.msra.mxu0 %v40
  %97 = vmatprep.subr.mxu0 0.0
  %98 = vmatpush1.msra.mxu0 %v41
  %99 = vmatprep.subr.mxu0 0.0
  %100 = vmatpush1.msra.mxu0 %v42
  %101 = vmatprep.subr.mxu0 0.0
  %102 = vmatpush1.msra.mxu0 %v43
  %103 = vmatprep.subr.mxu0 0.0
  %104 = vmatpush1.msra.mxu0 %v44
  %105 = vmatprep.subr.mxu0 0.0
  %106 = vmatpush1.msra.mxu0 %v45
  %107 = vmatprep.subr.mxu0 0.0
  %108 = vmatpush1.msra.mxu0 0.0
  %109 = vmatprep.subr.mxu0 0.0
  %110 = vmatpush1.msra.mxu0 0.0
  %111 = vmatprep.subr.mxu0 0.0
  %112 = vmatpush1.msra.mxu0 0.0
  %113 = vmatprep.subr.mxu0 0.0
  %114 = vmatpush1.msra.mxu0 0.0
  %115 = vmatprep.subr.mxu0 0.0
  %116 = vmatpush1.msra.mxu0 0.0
  %117 = vmatprep.subr.mxu0 0.0
  %118 = vmatpush1.msra.mxu0 0.0
  %119 = vmatprep.subr.mxu0 0.0
  %120 = vmatpush1.msra.mxu0 0.0
  %121 = vmatprep.subr.mxu0 0.0
  %122 = vmatpush1.msra.mxu0 0.0
  %123 = vmatprep.subr.mxu0 0.0
  %124 = vmatpush1.msra.mxu0 0.0
  %125 = vmatprep.subr.mxu0 0.0
  %126 = vmatpush1.msra.mxu0 0.0
  %127 = vmatprep.subr.mxu0 0.0
  %128 = vmatpush1.msra.mxu0 0.0
  %129 = vmatprep.subr.mxu0 0.0
  %130 = vmatpush1.msra.mxu0 0.0
  %131 = vmatprep.subr.mxu0 0.0
  %132 = vmatpush1.msra.mxu0 0.0
  %133 = vmatprep.subr.mxu0 0.0
  %134 = vmatpush1.msra.mxu0 0.0
  %135 = vmatprep.subr.mxu0 0.0
  %136 = vmatpush1.msra.mxu0 0.0
  %137 = vmatprep.subr.mxu0 0.0
  %138 = vmatpush1.msra.mxu0 0.0
  %139 = vmatprep.subr.mxu0 0.0
  %140 = vmatpush1.msra.mxu0 0.0
  %141 = vmatprep.subr.mxu0 0.0
  %142 = vmatpush1.msra.mxu0 0.0
  %143 = vmatprep.subr.mxu0 0.0
  %144 = vmatpush1.msra.mxu0 0.0
  %145 = vmatprep.subr.mxu0 0.0
  %146 = vmatpush1.msra.mxu0 0.0
  %147 = vmatprep.subr.mxu0 0.0
  %148 = vmatpush1.msra.mxu0 0.0
  %149 = vmatprep.subr.mxu0 0.0
  %150 = vmatpush1.msra.mxu0 0.0
  %151 = vmatprep.mubr.f32.mxu0 0.0
  %152 = vmatmul.mubr.f32.gmra.mrb[0].mxu0 %v58
  %v153 = vpop.f32.mrb[0].mxu0
  %v154 = vadd.f32 0.0, %v153
  %v155 = vpop.f32.mrb[0].mxu0
  %156 = vmatprep.mubr.f32.mxu0 0.0
  %157 = vmatmul.mubr.f32.gmra.mrb[0].mxu0 %v61
  %v158 = vpop.f32.mrb[0].mxu0
  %v159 = vadd.f32 0.0, %v158
  %v160 = vpop.f32.mrb[0].mxu0
  %161 = vmatprep.mubr.f32.mxu0 0.0
  %162 = vmatmul.mubr.f32.gmra.mrb[0].mxu0 %v64
  %v163 = vpop.f32.mrb[0].mxu0
  %v164 = vadd.f32 0.0, %v163
  %v165 = vpop.f32.mrb[0].mxu0
  %166 = vmatprep.mubr.f32.mxu0 0.0
  %167 = vmatmul.mubr.f32.gmra.mrb[0].mxu0 %v67
  %v168 = vpop.f32.mrb[0].mxu0
  %v169 = vadd.f32 0.0, %v168
  %v170 = vpop.f32.mrb[0].mxu0
  %171 = vmatprep.mubr.f32.mxu0 0.0
  %172 = vmatmul.mubr.f32.gmra.mrb[0].mxu0 %v70
  %v173 = vpop.f32.mrb[0].mxu0
  %v174 = vadd.f32 0.0, %v173
  %v175 = vpop.f32.mrb[0].mxu0
  %176 = vmatprep.mubr.f32.mxu0 0.0
  %177 = vmatmul.mubr.f32.gmra.mrb[0].mxu0 %v73
  %v178 = vpop.f32.mrb[0].mxu0
  %v179 = vadd.f32 0.0, %v178
  %v180 = vpop.f32.mrb[0].mxu0
  %181 = vmatprep.mubr.f32.mxu0 0.0
  %182 = vmatmul.mubr.f32.gmra.mrb[0].mxu0 %v76
  %v183 = vpop.f32.mrb[0].mxu0
  %v184 = vadd.f32 0.0, %v183
  %v185 = vpop.f32.mrb[0].mxu0
  %186 = vmatprep.mubr.f32.mxu0 0.0
  %187 = vmatmul.mubr.f32.gmra.mrb[0].mxu0 %v79
  %v188 = vpop.f32.mrb[0].mxu0
  %v189 = vadd.f32 0.0, %v188
  %v190 = vpop.f32.mrb[0].mxu0
  %191 = vmatprep.mubr.f32.mxu0 0.0
  %192 = vmatmul.mubr.f32.gmra.mrb[0].mxu0 %v82
  %v193 = vpop.f32.mrb[0].mxu0
  %v194 = vadd.f32 0.0, %v193
  %v195 = vpop.f32.mrb[0].mxu0
  %196 = vmatprep.mubr.f32.mxu0 0.0
  %197 = vmatmul.mubr.f32.gmra.mrb[0].mxu0 %v85
  %v198 = vpop.f32.mrb[0].mxu0
  %v199 = vadd.f32 0.0, %v198
  %v200 = vpop.f32.mrb[0].mxu0
  %201 = vdwg.mxu0
  %v202 = vld [vmem:[%s2] sm:$0xff]
  %v203 = vld [vmem:[%s2 + $0x8] sm:$0xff]
  %v204 = vld [vmem:[%s2 + $0x10] sm:$0xff]
  %v205 = vld [vmem:[%s2 + $0x18] sm:$0xff]
  %v206 = vld [vmem:[%s2 + $0x20] sm:$0xff]
  %v207 = vld [vmem:[%s2 + $0x28] sm:$0xff]
  %v208 = vld [vmem:[%s2 + $0x30] sm:$0xff]
  %v209 = vld [vmem:[%s2 + $0x38] sm:$0xff]
  %v210 = vld [vmem:[%s2 + $0x40] sm:$0xff]
  %v211 = vld [vmem:[%s2 + $0x48] sm:$0xff]
  %v212 = vld [vmem:[%s2 + $0x50] sm:$0xff]
  %v213 = vld [vmem:[%s2 + $0x58] sm:$0xff]
  %v214 = vld [vmem:[%s2 + $0x60] sm:$0xff]
  %v215 = vld [vmem:[%s2 + $0x68] sm:$0xff]
  %v216 = vld [vmem:[%s2 + $0x70] sm:$0xff]
  %v217 = vld [vmem:[%s2 + $0x78] sm:$0xff]
  %218 = vmatprep.subr.mxu0 0.0
  %219 = vmatpush1.msra.mxu0 %v202
  %220 = vmatprep.subr.mxu0 0.0
  %221 = vmatpush1.msra.mxu0 %v203
  %222 = vmatprep.subr.mxu0 0.0
  %223 = vmatpush1.msra.mxu0 %v204
  %224 = vmatprep.subr.mxu0 0.0
  %225 = vmatpush1.msra.mxu0 %v205
  %226 = vmatprep.subr.mxu0 0.0
  %227 = vmatpush1.msra.mxu0 %v206
  %228 = vmatprep.subr.mxu0 0.0
  %229 = vmatpush1.msra.mxu0 %v207
  %230 = vmatprep.subr.mxu0 0.0
  %231 = vmatpush1.msra.mxu0 %v208
  %232 = vmatprep.subr.mxu0 0.0
  %233 = vmatpush1.msra.mxu0 %v209
  %234 = vmatprep.subr.mxu0 0.0
  %235 = vmatpush1.msra.mxu0 %v210
  %236 = vmatprep.subr.mxu0 0.0
  %237 = vmatpush1.msra.mxu0 %v211
  %238 = vmatprep.subr.mxu0 0.0
  %239 = vmatpush1.msra.mxu0 %v212
  %240 = vmatprep.subr.mxu0 0.0
  %241 = vmatpush1.msra.mxu0 %v213
  %242 = vmatprep.subr.mxu0 0.0
  %243 = vmatpush1.msra.mxu0 %v214
  %244 = vmatprep.subr.mxu0 0.0
  %245 = vmatpush1.msra.mxu0 %v215
  %246 = vmatprep.subr.mxu0 0.0
  %247 = vmatpush1.msra.mxu0 %v216
  %248 = vmatprep.subr.mxu0 0.0
  %249 = vmatpush1.msra.mxu0 %v217
  %250 = vmatprep.subr.mxu0 0.0
  %251 = vmatpush1.msra.mxu0 0.0
  %252 = vmatprep.subr.mxu0 0.0
  %253 = vmatpush1.msra.mxu0 0.0
  %254 = vmatprep.subr.mxu0 0.0
  %255 = vmatpush1.msra.mxu0 0.0
  %256 = vmatprep.subr.mxu0 0.0
  %257 = vmatpush1.msra.mxu0 0.0
  %258 = vmatprep.subr.mxu0 0.0
  %259 = vmatpush1.msra.mxu0 0.0
  %260 = vmatprep.subr.mxu0 0.0
  %261 = vmatpush1.msra.mxu0 0.0
  %262 = vmatprep.subr.mxu0 0.0
  %263 = vmatpush1.msra.mxu0 0.0
  %264 = vmatprep.subr.mxu0 0.0
  %265 = vmatpush1.msra.mxu0 0.0
  %266 = vmatprep.subr.mxu0 0.0
  %267 = vmatpush1.msra.mxu0 0.0
  %268 = vmatprep.subr.mxu0 0.0
  %269 = vmatpush1.msra.mxu0 0.0
  %270 = vmatprep.subr.mxu0 0.0
  %271 = vmatpush1.msra.mxu0 0.0
  %272 = vmatprep.subr.mxu0 0.0
  %273 = vmatpush1.msra.mxu0 0.0
  %274 = vmatprep.subr.mxu0 0.0
  %275 = vmatpush1.msra.mxu0 0.0
  %276 = vmatprep.subr.mxu0 0.0
  %277 = vmatpush1.msra.mxu0 0.0
  %278 = vmatprep.subr.mxu0 0.0
  %279 = vmatpush1.msra.mxu0 0.0
  %280 = vmatprep.subr.mxu0 0.0
  %281 = vmatpush1.msra.mxu0 0.0
  %282 = vmatprep.mubr.f32.mxu0 0.0
  %283 = vmatmul.mubr.f32.gmra.mrb[0].mxu0 %v154
  %v284 = vpop.f32.mrb[0].mxu0
  %v285 = vadd.f32 0.0, %v284
  %v286 = vpop.f32.mrb[0].mxu0
  %287 = vmatprep.mubr.f32.mxu0 0.0
  %288 = vmatmul.mubr.f32.gmra.mrb[0].mxu0 %v159
  %v289 = vpop.f32.mrb[0].mxu0
  %v290 = vadd.f32 0.0, %v289
  %v291 = vpop.f32.mrb[0].mxu0
  %292 = vmatprep.mubr.f32.mxu0 0.0
  %293 = vmatmul.mubr.f32.gmra.mrb[0].mxu0 %v164
  %v294 = vpop.f32.mrb[0].mxu0
  %v295 = vadd.f32 0.0, %v294
  %v296 = vpop.f32.mrb[0].mxu0
  %297 = vmatprep.mubr.f32.mxu0 0.0
  %298 = vmatmul.mubr.f32.gmra.mrb[0].mxu0 %v169
  %v299 = vpop.f32.mrb[0].mxu0
  %v300 = vadd.f32 0.0, %v299
  %v301 = vpop.f32.mrb[0].mxu0
  %302 = vmatprep.mubr.f32.mxu0 0.0
  %303 = vmatmul.mubr.f32.gmra.mrb[0].mxu0 %v174
  %v304 = vpop.f32.mrb[0].mxu0
  %v305 = vadd.f32 0.0, %v304
  %v306 = vpop.f32.mrb[0].mxu0
  %307 = vmatprep.mubr.f32.mxu0 0.0
  %308 = vmatmul.mubr.f32.gmra.mrb[0].mxu0 %v179
  %v309 = vpop.f32.mrb[0].mxu0
  %v310 = vadd.f32 0.0, %v309
  %v311 = vpop.f32.mrb[0].mxu0
  %312 = vmatprep.mubr.f32.mxu0 0.0
  %313 = vmatmul.mubr.f32.gmra.mrb[0].mxu0 %v184
  %v314 = vpop.f32.mrb[0].mxu0
  %v315 = vadd.f32 0.0, %v314
  %v316 = vpop.f32.mrb[0].mxu0
  %317 = vmatprep.mubr.f32.mxu0 0.0
  %318 = vmatmul.mubr.f32.gmra.mrb[0].mxu0 %v189
  %v319 = vpop.f32.mrb[0].mxu0
  %v320 = vadd.f32 0.0, %v319
  %v321 = vpop.f32.mrb[0].mxu0
  %322 = vmatprep.mubr.f32.mxu0 0.0
  %323 = vmatmul.mubr.f32.gmra.mrb[0].mxu0 %v194
  %v324 = vpop.f32.mrb[0].mxu0
  %v325 = vadd.f32 0.0, %v324
  %v326 = vpop.f32.mrb[0].mxu0
  %327 = vmatprep.mubr.f32.mxu0 0.0
  %328 = vmatmul.mubr.f32.gmra.mrb[0].mxu0 %v199
  %v329 = vpop.f32.mrb[0].mxu0
  %v330 = vadd.f32 0.0, %v329
  %v331 = vpop.f32.mrb[0].mxu0
  %332 = vdwg.mxu0
  %v333 = vmul.f32 %v285, %v285
  %v334 = vmul.f32 %v290, %v290
  %v335 = vmul.f32 %v295, %v295
  %v336 = vmul.f32 %v300, %v300
  %v337 = vmul.f32 %v285, %v295
  %v338 = vmul.f32 %v290, %v300
  %v339 = vsub.f32 %v305, %v333
  %v340 = vsub.f32 %v310, %v334
  %v341 = vsub.f32 %v315, %v335
  %v342 = vsub.f32 %v320, %v336
  %v343 = vsub.f32 %v325, %v337
  %v344 = vsub.f32 %v330, %v338
  %v345 = vmul.f32 %v337, 2.0
  %v346 = vmul.f32 %v338, 2.0
  %v347 = vadd.f32 %v345, 0.0001
  %v348 = vadd.f32 %v346, 0.0001
  %v349 = vmul.f32 %v343, 2.0
  %v350 = vmul.f32 %v344, 2.0
  %v351 = vadd.f32 %v349, 0.0009
  %v352 = vadd.f32 %v350, 0.0009
  %v353 = vmul.f32 %v347, %v351
  %v354 = vmul.f32 %v348, %v352
  %v355 = vadd.f32 %v333, %v335
  %v356 = vadd.f32 %v334, %v336
  %v357 = vadd.f32 %v355, 0.0001
  %v358 = vadd.f32 %v356, 0.0001
  %v359 = vadd.f32 %v339, %v341
  %v360 = vadd.f32 %v340, %v342
  %v361 = vadd.f32 %v359, 0.0009
  %v362 = vadd.f32 %v360, 0.0009
  %v363 = vmul.f32 %v357, %v361
  %v364 = vmul.f32 %v358, %v362
  %v365 = vrcp.pop %v363
  %v366 = vmul.f32 %v353, %v365
  %v367 = vrcp.pop %v364
  %v368 = vmul.f32 %v354, %v367
  %v369 = vadd.f32 %v366, %v368
  %v370 = vrot.slane %v369, 4
  %v371 = vadd.f32 %v369, %v370
  %v372 = vrot.slane %v371, 2
  %v373 = vadd.f32 %v371, %v372
  %v374 = vrot.slane %v373, 1
  %v375 = vadd.f32 %v373, %v374
  %376 = vst [vmem:[%s3] sm:$0x1] %v32
  %377 = vst [vmem:[%s3 + $0x1] sm:$0x1] %v39
  %378 = vst [vmem:[%s3 + $0x2] sm:$0x1] %v375
  %379 = vst [vmem:[%s3 + $0x3] sm:$0x1f] 0.0
  // Predicated region
  $region14: #{_masked_mae_plus_ssim_jit.1} parent=0 // pred_check
    _
  $region15: #{_masked_mae_plus_ssim_jit.1} parent=0 // pred_check_branch
    %381 = sbr.rel (0) target = $region17
  $region16: #{_masked_mae_plus_ssim_jit.1} parent=0 // pred_region
    _
  $region17: #{_masked_mae_plus_ssim_jit.1} parent=0 // pred_fallthru
    _
  // Predicated region
  $region18: #{_masked_mae_plus_ssim_jit.1} parent=0 // pred_check
    _
  $region19: #{_masked_mae_plus_ssim_jit.1} parent=0 // pred_check_branch
    %383 = sbr.rel (0) target = $region21
  $region20: #{_masked_mae_plus_ssim_jit.1} parent=0 // pred_region
    _
  $region21: #{_masked_mae_plus_ssim_jit.1} parent=0 // pred_fallthru
    _

</llo_original>
